<compile_context>
chip_gen: v5e
topology: v5e:2x2
jax: 0.10.0
libtpu: 0.0.40
codegen_flags: <defaults>
</compile_context>

<pallas_src>
import math
import functools

import jax
import jax.numpy as jnp
from jax.experimental import pallas as pl
from jax.experimental.pallas import tpu as pltpu


def _mha_kernel(x_ref, w_qkv_ref, b_qkv_ref, wo_ref, bo_ref,
                o_ref,
                *, head_num: int, sub_dim: int, seq_len: int,
                batch_block: int, out_features: int):
    cdt = jnp.bfloat16                       # MXU operand dtype; accumulation stays f32

    # ---- Fused Q/K/V projection + bias + ReLU for the whole batch block ----
    # x_ref: (bb*S, 3*Fin) = [q | k | v];  w_qkv_ref: block-diagonal (3*Fin, 3*Fout)
    x = x_ref[...].astype(cdt)
    qkv = jnp.dot(x, w_qkv_ref[...], preferred_element_type=jnp.float32)
    qkv = jnp.maximum(qkv + b_qkv_ref[...], 0.0)        # (bb*S, 3*Fout), f32
    qkv_c = qkv.astype(cdt)

    wo = wo_ref[...]                          # bf16 (Fout, Fout)
    bo = bo_ref[...]                          # f32  (1, Fout)

    scale = 1.0 / math.sqrt(float(sub_dim))
    nt_dims = (((1,), (1,)), ((), ()))        # contract last dims: Qh @ Kh^T without a transpose

    k_off = out_features
    v_off = 2 * out_features

    # Per-batch-element, per-head attention. No mask, no dropout (mask=None, train=False).
    for b in range(batch_block):
        r0 = b * seq_len
        acc = jnp.zeros((seq_len, out_features), jnp.float32)
        for h in range(head_num):
            lo = h * sub_dim
            hi = lo + sub_dim
            Qh = qkv_c[r0:r0 + seq_len, lo:hi]                    # (S, sub)
            Kh = qkv_c[r0:r0 + seq_len, k_off + lo:k_off + hi]    # (S, sub)
            Vh = qkv_c[r0:r0 + seq_len, v_off + lo:v_off + hi]    # (S, sub)

            scores = jax.lax.dot_general(
                Qh, Kh, nt_dims, preferred_element_type=jnp.float32) * scale  # (S, S)
            scores = scores - jnp.max(scores, axis=-1, keepdims=True)
            p = jnp.exp(scores)
            attn = p * pl.reciprocal(jnp.sum(p, axis=-1, keepdims=True), approx=True)

            head_out = jnp.dot(attn.astype(cdt), Vh,
                               preferred_element_type=jnp.float32)            # (S, sub)
            # Accumulate this head's contribution via the matching rows of Wo
            # (replaces concat(head_outs) @ Wo; row slices are sublane-aligned).
            acc = acc + jnp.dot(head_out.astype(cdt), wo[lo:hi, :],
                                preferred_element_type=jnp.float32)

        o_ref[r0:r0 + seq_len, :] = jnp.maximum(acc + bo, 0.0).astype(o_ref.dtype)


def multi_head_attention(q, k, v, params, head_num, *, num_batch_blocks=2):
    """q, k, v: (B, S, Fin) float32. params: dict of transposed weights / biases."""
    B, S, Fin = q.shape
    Fout = params["wq"].shape[1]
    sub_dim = Fout // head_num

    # >=2 parallel grid steps keep both v7x TensorCores fed; on single-TC chips
    # (v5e/v6e) num_batch_blocks=1 removes the remaining per-step overhead.
    nb = max(1, min(num_batch_blocks, B))
    while B % nb:
        nb -= 1
    bb = B // nb
    rows = bb * S
    if nb != 1 and rows % 8 != 0:     # keep the (8, 128) block constraint satisfied
        nb, bb, rows = 1, B, B * S

    bf = jnp.bfloat16

    # Pack inputs lane-wise: one DMA + one MXU LHS instead of three. Batch is flattened
    # into the matmul M dimension (free row-major reshape).
    x = jnp.concatenate([q.reshape(B * S, Fin),
                         k.reshape(B * S, Fin),
                         v.reshape(B * S, Fin)], axis=1)            # (B*S, 3*Fin), f32

    # Block-diagonal fused QKV weight (bf16): one MXU weight load instead of three.
    wq, wk, wv, wo = (params[n].astype(bf) for n in ("wq", "wk", "wv", "wo"))
    zero = jnp.zeros((Fin, Fout), bf)
    w_qkv = jnp.concatenate([
        jnp.concatenate([wq,   zero, zero], axis=1),
        jnp.concatenate([zero, wk,   zero], axis=1),
        jnp.concatenate([zero, zero, wv  ], axis=1),
    ], axis=0)                                                       # (3*Fin, 3*Fout)
    b_qkv = jnp.concatenate([params["bq"], params["bk"], params["bv"]], axis=1)  # (1, 3*Fout)

    kernel = functools.partial(
        _mha_kernel, head_num=head_num, sub_dim=sub_dim,
        seq_len=S, batch_block=bb, out_features=Fout)

    out = pl.pallas_call(
        kernel,
        out_shape=jax.ShapeDtypeStruct((B * S, Fout), jnp.float32),
        grid_spec=pltpu.PrefetchScalarGridSpec(
            num_scalar_prefetch=0,
            grid=(nb,),
            in_specs=[
                pl.BlockSpec((rows, 3 * Fin), lambda i: (i, 0)),     # packed q|k|v
                pl.BlockSpec((3 * Fin, 3 * Fout), lambda i: (0, 0)),  # block-diag W_qkv
                pl.BlockSpec((1, 3 * Fout), lambda i: (0, 0)),        # packed biases
                pl.BlockSpec((Fout, Fout), lambda i: (0, 0)),         # Wo
                pl.BlockSpec((1, Fout), lambda i: (0, 0)),            # bo
            ],
            out_specs=pl.BlockSpec((rows, Fout), lambda i: (i, 0)),
        ),
        compiler_params=pltpu.CompilerParams(
            dimension_semantics=("parallel",)),
    )(x, w_qkv, b_qkv, wo, params["bo"])

    return out.reshape(B, S, Fout)


def _reference(q, k, v, params, head_num):
    """Pure-JAX f32 reference reproducing the PyTorch forward (mask=None, train=False)."""
    def lin(x, w, b):
        return x @ w + b[0]

    Q = jax.nn.relu(lin(q, params["wq"], params["bq"]))
    K = jax.nn.relu(lin(k, params["wk"], params["bk"]))
    V = jax.nn.relu(lin(v, params["wv"], params["bv"]))

    B, S, Fout = Q.shape
    sub = Fout // head_num

    def to_batches(x):
        return x.reshape(B, S, head_num, sub).transpose(0, 2, 1, 3).reshape(B * head_num, S, sub)

    Qb, Kb, Vb = to_batches(Q), to_batches(K), to_batches(V)
    scores = jnp.einsum("bqd,bkd->bqk", Qb, Kb) / math.sqrt(sub)
    attn = jax.nn.softmax(scores, axis=-1)
    y = jnp.einsum("bqk,bkd->bqd", attn, Vb)
    y = y.reshape(B, head_num, S, sub).transpose(0, 2, 1, 3).reshape(B, S, Fout)
    return jax.nn.relu(lin(y, params["wo"], params["bo"]))


def init_params(key, in_features, out_features):
    """Deterministic init mimicking nn.Linear (uniform +-1/sqrt(fan_in)).
    Weights stored transposed: (in_features, out_features)."""
    keys = jax.random.split(key, 8)
    bound_in = 1.0 / math.sqrt(in_features)
    bound_out = 1.0 / math.sqrt(out_features)

    def u(k, shape, bound):
        return jax.random.uniform(k, shape, jnp.float32, -bound, bound)

    return {
        "wq": u(keys[0], (in_features, out_features), bound_in),
        "bq": u(keys[1], (1, out_features), bound_in),
        "wk": u(keys[2], (in_features, out_features), bound_in),
        "bk": u(keys[3], (1, out_features), bound_in),
        "wv": u(keys[4], (in_features, out_features), bound_in),
        "bv": u(keys[5], (1, out_features), bound_in),
        "wo": u(keys[6], (out_features, out_features), bound_out),
        "bo": u(keys[7], (1, out_features), bound_out),
    }


if __name__ == "__main__":
    B, S = 2, 8
    IN_FEATURES = 32
    OUT_FEATURES = 32
    HEAD_NUM = 4

    root = jax.random.PRNGKey(0)
    kq, kk, kv, kp = jax.random.split(root, 4)
    q = jax.random.normal(kq, (B, S, IN_FEATURES), jnp.float32)
    k = jax.random.normal(kk, (B, S, IN_FEATURES), jnp.float32)
    v = jax.random.normal(kv, (B, S, IN_FEATURES), jnp.float32)
    params = init_params(kp, IN_FEATURES, OUT_FEATURES)

    out = multi_head_attention(q, k, v, params, HEAD_NUM)
    out = jax.block_until_ready(out)

    ref = _reference(q, k, v, params, HEAD_NUM)
    assert out.shape == (B, S, OUT_FEATURES)
    # Looser tolerance than the f32 version: kernel uses bf16 MXU operands (f32 accumulate)
    # and an approximate EUP reciprocal in the softmax, per the TPU perf guidance.
    assert jnp.allclose(out, ref, atol=5e-2, rtol=5e-2), "Pallas output mismatch vs JAX reference"

    print("KERNEL_OK")
</pallas_src>

<mosaic_0001>
module attributes {stable_mosaic.version = 11 : i64} {
  func.func @_mha_kernel(%arg0: i32, %arg1: memref<8x96xf32, #tpu.memory_space<vmem>>, %arg2: memref<96x96xbf16, #tpu.memory_space<vmem>>, %arg3: memref<1x96xf32, #tpu.memory_space<vmem>>, %arg4: memref<32x32xbf16, #tpu.memory_space<vmem>>, %arg5: memref<1x32xf32, #tpu.memory_space<vmem>>, %arg6: memref<8x32xf32, #tpu.memory_space<vmem>>) attributes {dimension_semantics = [#tpu.dimension_semantics<parallel>], iteration_bounds = array<i64: 2>, scalar_prefetch = 0 : i64, scratch_operands = 0 : i64, tpu.core_type = #tpu.core_type<tc>, window_params = [{transform_indices = @transform_0, window_bounds = array<i64: 8, 96>}, {pipeline_mode = #tpu.pipeline_mode<synchronous>, transform_indices = @transform_1, window_bounds = array<i64: 96, 96>}, {pipeline_mode = #tpu.pipeline_mode<synchronous>, transform_indices = @transform_2, window_bounds = array<i64: 1, 96>}, {pipeline_mode = #tpu.pipeline_mode<synchronous>, transform_indices = @transform_3, window_bounds = array<i64: 32, 32>}, {pipeline_mode = #tpu.pipeline_mode<synchronous>, transform_indices = @transform_4, window_bounds = array<i64: 1, 32>}, {transform_indices = @transform_5, window_bounds = array<i64: 8, 32>}]} {
    %c0 = arith.constant 0 : index
    %c0_0 = arith.constant 0 : index
    %0 = vector.load %arg1[%c0, %c0_0] : memref<8x96xf32, #tpu.memory_space<vmem>>, vector<8x96xf32>
    %1 = arith.truncf %0 : vector<8x96xf32> to vector<8x96xbf16>
    %c0_1 = arith.constant 0 : index
    %c0_2 = arith.constant 0 : index
    %2 = vector.load %arg2[%c0_1, %c0_2] : memref<96x96xbf16, #tpu.memory_space<vmem>>, vector<96x96xbf16>
    %cst = arith.constant dense<0.000000e+00> : vector<8x96xf32>
    %3 = tpu.matmul %1, %2, %cst {dimension_numbers = #tpu.dot_dimension_numbers<[1], [0], [0], [1], [0, 0, 1, 1], [], []>} : vector<8x96xbf16>, vector<96x96xbf16>, vector<8x96xf32> -> vector<8x96xf32>
    %c0_3 = arith.constant 0 : index
    %c0_4 = arith.constant 0 : index
    %4 = vector.load %arg3[%c0_3, %c0_4] : memref<1x96xf32, #tpu.memory_space<vmem>>, vector<1x96xf32>
    %5 = vector.broadcast %4 : vector<1x96xf32> to vector<8x96xf32>
    %6 = arith.addf %3, %5 : vector<8x96xf32>
    %cst_5 = arith.constant 0.000000e+00 : f32
    %7 = vector.broadcast %cst_5 : f32 to vector<8x96xf32>
    %8 = arith.maximumf %6, %7 : vector<8x96xf32>
    %9 = arith.truncf %8 : vector<8x96xf32> to vector<8x96xbf16>
    %c0_6 = arith.constant 0 : index
    %c0_7 = arith.constant 0 : index
    %10 = vector.load %arg4[%c0_6, %c0_7] : memref<32x32xbf16, #tpu.memory_space<vmem>>, vector<32x32xbf16>
    %c0_8 = arith.constant 0 : index
    %c0_9 = arith.constant 0 : index
    %11 = vector.load %arg5[%c0_8, %c0_9] : memref<1x32xf32, #tpu.memory_space<vmem>>, vector<1x32xf32>
    %cst_10 = arith.constant 0.000000e+00 : f32
    %12 = vector.broadcast %cst_10 : f32 to vector<8x32xf32>
    %13 = vector.extract_strided_slice %9 {offsets = [0, 0], sizes = [8, 8], strides = [1, 1]} : vector<8x96xbf16> to vector<8x8xbf16>
    %14 = vector.extract_strided_slice %9 {offsets = [0, 32], sizes = [8, 8], strides = [1, 1]} : vector<8x96xbf16> to vector<8x8xbf16>
    %15 = vector.extract_strided_slice %9 {offsets = [0, 64], sizes = [8, 8], strides = [1, 1]} : vector<8x96xbf16> to vector<8x8xbf16>
    %cst_11 = arith.constant dense<0.000000e+00> : vector<8x8xf32>
    %16 = tpu.matmul %13, %14, %cst_11 {dimension_numbers = #tpu.dot_dimension_numbers<[1], [1], [0], [0], [0, 0, 1, 0], [], []>} : vector<8x8xbf16>, vector<8x8xbf16>, vector<8x8xf32> -> vector<8x8xf32>
    %cst_12 = arith.constant 0.353553385 : f32
    %17 = vector.broadcast %cst_12 : f32 to vector<8x8xf32>
    %18 = arith.mulf %16, %17 : vector<8x8xf32>
    %cst_13 = arith.constant dense<0xFF800000> : vector<8xf32>
    %19 = vector.multi_reduction <maximumf>, %18, %cst_13 [1] : vector<8x8xf32> to vector<8xf32>
    %20 = vector.shape_cast %19 : vector<8xf32> to vector<8x1xf32>
    %21 = vector.broadcast %20 : vector<8x1xf32> to vector<8x8xf32>
    %22 = arith.subf %18, %21 : vector<8x8xf32>
    %23 = math.exp %22 : vector<8x8xf32>
    %cst_14 = arith.constant dense<0.000000e+00> : vector<8xf32>
    %24 = vector.multi_reduction <add>, %23, %cst_14 [1] : vector<8x8xf32> to vector<8xf32>
    %25 = vector.shape_cast %24 : vector<8xf32> to vector<8x1xf32>
    %26 = tpu.reciprocal %25 {approx = true} : vector<8x1xf32> -> vector<8x1xf32>
    %27 = vector.broadcast %26 : vector<8x1xf32> to vector<8x8xf32>
    %28 = arith.mulf %23, %27 : vector<8x8xf32>
    %29 = arith.truncf %28 : vector<8x8xf32> to vector<8x8xbf16>
    %cst_15 = arith.constant dense<0.000000e+00> : vector<8x8xf32>
    %30 = tpu.matmul %29, %15, %cst_15 {dimension_numbers = #tpu.dot_dimension_numbers<[1], [0], [0], [1], [0, 0, 1, 1], [], []>} : vector<8x8xbf16>, vector<8x8xbf16>, vector<8x8xf32> -> vector<8x8xf32>
    %31 = arith.truncf %30 : vector<8x8xf32> to vector<8x8xbf16>
    %32 = vector.extract_strided_slice %10 {offsets = [0, 0], sizes = [8, 32], strides = [1, 1]} : vector<32x32xbf16> to vector<8x32xbf16>
    %cst_16 = arith.constant dense<0.000000e+00> : vector<8x32xf32>
    %33 = tpu.matmul %31, %32, %cst_16 {dimension_numbers = #tpu.dot_dimension_numbers<[1], [0], [0], [1], [0, 0, 1, 1], [], []>} : vector<8x8xbf16>, vector<8x32xbf16>, vector<8x32xf32> -> vector<8x32xf32>
    %34 = arith.addf %12, %33 : vector<8x32xf32>
    %35 = vector.extract_strided_slice %9 {offsets = [0, 8], sizes = [8, 8], strides = [1, 1]} : vector<8x96xbf16> to vector<8x8xbf16>
    %36 = vector.extract_strided_slice %9 {offsets = [0, 40], sizes = [8, 8], strides = [1, 1]} : vector<8x96xbf16> to vector<8x8xbf16>
    %37 = vector.extract_strided_slice %9 {offsets = [0, 72], sizes = [8, 8], strides = [1, 1]} : vector<8x96xbf16> to vector<8x8xbf16>
    %cst_17 = arith.constant dense<0.000000e+00> : vector<8x8xf32>
    %38 = tpu.matmul %35, %36, %cst_17 {dimension_numbers = #tpu.dot_dimension_numbers<[1], [1], [0], [0], [0, 0, 1, 0], [], []>} : vector<8x8xbf16>, vector<8x8xbf16>, vector<8x8xf32> -> vector<8x8xf32>
    %cst_18 = arith.constant 0.353553385 : f32
    %39 = vector.broadcast %cst_18 : f32 to vector<8x8xf32>
    %40 = arith.mulf %38, %39 : vector<8x8xf32>
    %cst_19 = arith.constant dense<0xFF800000> : vector<8xf32>
    %41 = vector.multi_reduction <maximumf>, %40, %cst_19 [1] : vector<8x8xf32> to vector<8xf32>
    %42 = vector.shape_cast %41 : vector<8xf32> to vector<8x1xf32>
    %43 = vector.broadcast %42 : vector<8x1xf32> to vector<8x8xf32>
    %44 = arith.subf %40, %43 : vector<8x8xf32>
    %45 = math.exp %44 : vector<8x8xf32>
    %cst_20 = arith.constant dense<0.000000e+00> : vector<8xf32>
    %46 = vector.multi_reduction <add>, %45, %cst_20 [1] : vector<8x8xf32> to vector<8xf32>
    %47 = vector.shape_cast %46 : vector<8xf32> to vector<8x1xf32>
    %48 = tpu.reciprocal %47 {approx = true} : vector<8x1xf32> -> vector<8x1xf32>
    %49 = vector.broadcast %48 : vector<8x1xf32> to vector<8x8xf32>
    %50 = arith.mulf %45, %49 : vector<8x8xf32>
    %51 = arith.truncf %50 : vector<8x8xf32> to vector<8x8xbf16>
    %cst_21 = arith.constant dense<0.000000e+00> : vector<8x8xf32>
    %52 = tpu.matmul %51, %37, %cst_21 {dimension_numbers = #tpu.dot_dimension_numbers<[1], [0], [0], [1], [0, 0, 1, 1], [], []>} : vector<8x8xbf16>, vector<8x8xbf16>, vector<8x8xf32> -> vector<8x8xf32>
    %53 = arith.truncf %52 : vector<8x8xf32> to vector<8x8xbf16>
    %54 = vector.extract_strided_slice %10 {offsets = [8, 0], sizes = [8, 32], strides = [1, 1]} : vector<32x32xbf16> to vector<8x32xbf16>
    %cst_22 = arith.constant dense<0.000000e+00> : vector<8x32xf32>
    %55 = tpu.matmul %53, %54, %cst_22 {dimension_numbers = #tpu.dot_dimension_numbers<[1], [0], [0], [1], [0, 0, 1, 1], [], []>} : vector<8x8xbf16>, vector<8x32xbf16>, vector<8x32xf32> -> vector<8x32xf32>
    %56 = arith.addf %34, %55 : vector<8x32xf32>
    %57 = vector.extract_strided_slice %9 {offsets = [0, 16], sizes = [8, 8], strides = [1, 1]} : vector<8x96xbf16> to vector<8x8xbf16>
    %58 = vector.extract_strided_slice %9 {offsets = [0, 48], sizes = [8, 8], strides = [1, 1]} : vector<8x96xbf16> to vector<8x8xbf16>
    %59 = vector.extract_strided_slice %9 {offsets = [0, 80], sizes = [8, 8], strides = [1, 1]} : vector<8x96xbf16> to vector<8x8xbf16>
    %cst_23 = arith.constant dense<0.000000e+00> : vector<8x8xf32>
    %60 = tpu.matmul %57, %58, %cst_23 {dimension_numbers = #tpu.dot_dimension_numbers<[1], [1], [0], [0], [0, 0, 1, 0], [], []>} : vector<8x8xbf16>, vector<8x8xbf16>, vector<8x8xf32> -> vector<8x8xf32>
    %cst_24 = arith.constant 0.353553385 : f32
    %61 = vector.broadcast %cst_24 : f32 to vector<8x8xf32>
    %62 = arith.mulf %60, %61 : vector<8x8xf32>
    %cst_25 = arith.constant dense<0xFF800000> : vector<8xf32>
    %63 = vector.multi_reduction <maximumf>, %62, %cst_25 [1] : vector<8x8xf32> to vector<8xf32>
    %64 = vector.shape_cast %63 : vector<8xf32> to vector<8x1xf32>
    %65 = vector.broadcast %64 : vector<8x1xf32> to vector<8x8xf32>
    %66 = arith.subf %62, %65 : vector<8x8xf32>
    %67 = math.exp %66 : vector<8x8xf32>
    %cst_26 = arith.constant dense<0.000000e+00> : vector<8xf32>
    %68 = vector.multi_reduction <add>, %67, %cst_26 [1] : vector<8x8xf32> to vector<8xf32>
    %69 = vector.shape_cast %68 : vector<8xf32> to vector<8x1xf32>
    %70 = tpu.reciprocal %69 {approx = true} : vector<8x1xf32> -> vector<8x1xf32>
    %71 = vector.broadcast %70 : vector<8x1xf32> to vector<8x8xf32>
    %72 = arith.mulf %67, %71 : vector<8x8xf32>
    %73 = arith.truncf %72 : vector<8x8xf32> to vector<8x8xbf16>
    %cst_27 = arith.constant dense<0.000000e+00> : vector<8x8xf32>
    %74 = tpu.matmul %73, %59, %cst_27 {dimension_numbers = #tpu.dot_dimension_numbers<[1], [0], [0], [1], [0, 0, 1, 1], [], []>} : vector<8x8xbf16>, vector<8x8xbf16>, vector<8x8xf32> -> vector<8x8xf32>
    %75 = arith.truncf %74 : vector<8x8xf32> to vector<8x8xbf16>
    %76 = vector.extract_strided_slice %10 {offsets = [16, 0], sizes = [8, 32], strides = [1, 1]} : vector<32x32xbf16> to vector<8x32xbf16>
    %cst_28 = arith.constant dense<0.000000e+00> : vector<8x32xf32>
    %77 = tpu.matmul %75, %76, %cst_28 {dimension_numbers = #tpu.dot_dimension_numbers<[1], [0], [0], [1], [0, 0, 1, 1], [], []>} : vector<8x8xbf16>, vector<8x32xbf16>, vector<8x32xf32> -> vector<8x32xf32>
    %78 = arith.addf %56, %77 : vector<8x32xf32>
    %79 = vector.extract_strided_slice %9 {offsets = [0, 24], sizes = [8, 8], strides = [1, 1]} : vector<8x96xbf16> to vector<8x8xbf16>
    %80 = vector.extract_strided_slice %9 {offsets = [0, 56], sizes = [8, 8], strides = [1, 1]} : vector<8x96xbf16> to vector<8x8xbf16>
    %81 = vector.extract_strided_slice %9 {offsets = [0, 88], sizes = [8, 8], strides = [1, 1]} : vector<8x96xbf16> to vector<8x8xbf16>
    %cst_29 = arith.constant dense<0.000000e+00> : vector<8x8xf32>
    %82 = tpu.matmul %79, %80, %cst_29 {dimension_numbers = #tpu.dot_dimension_numbers<[1], [1], [0], [0], [0, 0, 1, 0], [], []>} : vector<8x8xbf16>, vector<8x8xbf16>, vector<8x8xf32> -> vector<8x8xf32>
    %cst_30 = arith.constant 0.353553385 : f32
    %83 = vector.broadcast %cst_30 : f32 to vector<8x8xf32>
    %84 = arith.mulf %82, %83 : vector<8x8xf32>
    %cst_31 = arith.constant dense<0xFF800000> : vector<8xf32>
    %85 = vector.multi_reduction <maximumf>, %84, %cst_31 [1] : vector<8x8xf32> to vector<8xf32>
    %86 = vector.shape_cast %85 : vector<8xf32> to vector<8x1xf32>
    %87 = vector.broadcast %86 : vector<8x1xf32> to vector<8x8xf32>
    %88 = arith.subf %84, %87 : vector<8x8xf32>
    %89 = math.exp %88 : vector<8x8xf32>
    %cst_32 = arith.constant dense<0.000000e+00> : vector<8xf32>
    %90 = vector.multi_reduction <add>, %89, %cst_32 [1] : vector<8x8xf32> to vector<8xf32>
    %91 = vector.shape_cast %90 : vector<8xf32> to vector<8x1xf32>
    %92 = tpu.reciprocal %91 {approx = true} : vector<8x1xf32> -> vector<8x1xf32>
    %93 = vector.broadcast %92 : vector<8x1xf32> to vector<8x8xf32>
    %94 = arith.mulf %89, %93 : vector<8x8xf32>
    %95 = arith.truncf %94 : vector<8x8xf32> to vector<8x8xbf16>
    %cst_33 = arith.constant dense<0.000000e+00> : vector<8x8xf32>
    %96 = tpu.matmul %95, %81, %cst_33 {dimension_numbers = #tpu.dot_dimension_numbers<[1], [0], [0], [1], [0, 0, 1, 1], [], []>} : vector<8x8xbf16>, vector<8x8xbf16>, vector<8x8xf32> -> vector<8x8xf32>
    %97 = arith.truncf %96 : vector<8x8xf32> to vector<8x8xbf16>
    %98 = vector.extract_strided_slice %10 {offsets = [24, 0], sizes = [8, 32], strides = [1, 1]} : vector<32x32xbf16> to vector<8x32xbf16>
    %cst_34 = arith.constant dense<0.000000e+00> : vector<8x32xf32>
    %99 = tpu.matmul %97, %98, %cst_34 {dimension_numbers = #tpu.dot_dimension_numbers<[1], [0], [0], [1], [0, 0, 1, 1], [], []>} : vector<8x8xbf16>, vector<8x32xbf16>, vector<8x32xf32> -> vector<8x32xf32>
    %100 = arith.addf %78, %99 : vector<8x32xf32>
    %101 = vector.broadcast %11 : vector<1x32xf32> to vector<8x32xf32>
    %102 = arith.addf %100, %101 : vector<8x32xf32>
    %cst_35 = arith.constant 0.000000e+00 : f32
    %103 = vector.broadcast %cst_35 : f32 to vector<8x32xf32>
    %104 = arith.maximumf %102, %103 : vector<8x32xf32>
    %c0_36 = arith.constant 0 : index
    %c0_37 = arith.constant 0 : index
    %105 = vector.load %arg6[%c0_36, %c0_37] : memref<8x32xf32, #tpu.memory_space<vmem>>, vector<8x32xf32>
    tpu.vector_store %arg6[%c0_36, %c0_37], %104 {strides = array<i32>} : memref<8x32xf32, #tpu.memory_space<vmem>>, vector<8x32xf32>,
    return
  }
  func.func @transform_0(%arg0: i32) -> (i32, i32) {
    %c0_i32 = arith.constant 0 : i32
    %c0_i32_0 = arith.constant 0 : i32
    return %arg0, %c0_i32 : i32, i32
  }
  func.func @transform_1(%arg0: i32) -> (i32, i32) {
    %c0_i32 = arith.constant 0 : i32
    %c0_i32_0 = arith.constant 0 : i32
    %c0_i32_1 = arith.constant 0 : i32
    return %c0_i32, %c0_i32_0 : i32, i32
  }
  func.func @transform_2(%arg0: i32) -> (i32, i32) {
    %c0_i32 = arith.constant 0 : i32
    %c0_i32_0 = arith.constant 0 : i32
    %c0_i32_1 = arith.constant 0 : i32
    return %c0_i32, %c0_i32_0 : i32, i32
  }
  func.func @transform_3(%arg0: i32) -> (i32, i32) {
    %c0_i32 = arith.constant 0 : i32
    %c0_i32_0 = arith.constant 0 : i32
    %c0_i32_1 = arith.constant 0 : i32
    return %c0_i32, %c0_i32_0 : i32, i32
  }
  func.func @transform_4(%arg0: i32) -> (i32, i32) {
    %c0_i32 = arith.constant 0 : i32
    %c0_i32_0 = arith.constant 0 : i32
    %c0_i32_1 = arith.constant 0 : i32
    return %c0_i32, %c0_i32_0 : i32, i32
  }
  func.func @transform_5(%arg0: i32) -> (i32, i32) {
    %c0_i32 = arith.constant 0 : i32
    %c0_i32_0 = arith.constant 0 : i32
    return %arg0, %c0_i32 : i32, i32
  }
}

</mosaic_0001>

<llo_original>
// kernel: tpu_custom_call.1
$region0: #{tpu_custom_call.1}
  #allocation0 [shape = 'u32[]', space=smem, size = 0x4, offset = 0x4, fixed_abs, tag = 'smem constant byte address 0x4 - core index']
  #allocation1 [shape = 'u32[72,128]{1,0:T(1,128)}', space=vmem, size = 0x9000, scoped, tag = 'internal scratch']
  %s0 = inlined_call_operand.hbm [shape: f32[16,96], index: 0, kind: input, shape index: {}]
  %s1 = inlined_call_operand.hbm [shape: bf16[96,96], index: 1, kind: input, shape index: {}]
  %s2 = inlined_call_operand.vmem [shape: f32[1,96], index: 2, kind: input, shape index: {}]
  %s3 = inlined_call_operand.hbm [shape: bf16[32,32], index: 3, kind: input, shape index: {}]
  %s4 = inlined_call_operand.vmem [shape: f32[1,32], index: 4, kind: input, shape index: {}]
  %s5 = inlined_call_operand.hbm [shape: f32[16,32], index: 5, kind: output, shape index: {}]
  %s6 = sld [smem:[#allocation0]]
  $region65: #{tpu_custom_call.1} parent=0
    _
  %s8 = ssub.s32 1, %s6
  %s9 = scalar_select 0, %s8, %s6
  $region1: #{tpu_custom_call.1} parent=0
    #allocation2 [shape = 'u8[8192]{0}', space=vmem, size = 0x2000, scoped, tag = 'input window, operand 0']
    #allocation3 [shape = 's32[2]{0}', space=sflag, size = 0x8, scoped, tag = 'scoped memory for tpu_custom_call.1']
    #allocation4 [shape = 's32[2]{0}', space=sflag, size = 0x8, scoped, tag = 'scoped memory for tpu_custom_call.1']
    #allocation5 [shape = 'u8[24576]{0}', space=vmem, size = 0x6000, scoped, tag = 'input window, operand 1, single buffered']
    #allocation6 [shape = 's32[1]{0}', space=sflag, size = 0x4, scoped, tag = 'scoped memory for tpu_custom_call.1']
    #allocation7 [shape = 'u8[8192]{0}', space=vmem, size = 0x2000, scoped, tag = 'input window, operand 3, single buffered']
    #allocation8 [shape = 'u8[8192]{0}', space=vmem, size = 0x2000, scoped, tag = 'output window, operand 0']
    %10 = vsyncpa [#allocation3], 0
    %s11 = scalar_lea.sflag [#allocation3], 1
    %12 = vsyncpa %s11, 0
    %13 = vsyncpa [#allocation6], 0
    %14 = vsyncpa [#allocation4], 0
    %s15 = scalar_lea.sflag [#allocation4], 1
    %16 = vsyncpa %s15, 0
    loop: start=0, step=1, limit=4
    $region2: #{tpu_custom_call.1} parent=1 // loop_pre_header
      _
    $region3: #{tpu_custom_call.1} parent=1 // loop_header
      %s18 = sphi 0, %s22
      %p19 = scmp.ge.s32.totalorder %s18, 4
      %s28 = sphi 0, %s30
      %s31 = sphi 0, %s28
      %s32 = sphi 0, %s31
      %s48 = sphi 0, %s32
      %s52 = sphi 0, %s52
      %s54 = sphi 0, %s52
      %s55 = sphi 0, %s54
      %s69 = sphi 0, %s55
      %s73 = sphi 0, %s73
      %s75 = sphi 0, %s73
      %s76 = sphi 0, %s75
      %s90 = sphi 0, %s76
      %s94 = sphi 0, %s94
      %s96 = sphi 0, %s94
      %s97 = sphi 0, %s96
      %s111 = sphi 0, %s97
      %s115 = sphi 0, %s115
      %s117 = sphi 0, %s115
      %s118 = sphi 0, %s117
      %s132 = sphi 0, %s118
      %s138 = sphi 0, %s140
      %s141 = sphi 0, %s138
      %s142 = sphi 0, %s141
      %s158 = sphi 0, %s142
    $region4: #{tpu_custom_call.1} parent=1 // loop_header_branch
      %21 = sbr.rel (%p19) target = $region8
    $region5: #{tpu_custom_call.1} parent=1 // loop_body
      %s23 = ssub.s32 %s18, 1
      %s24 = ssub.s32 %s18, 2
      %s25 = sadd.s32 %s18, 1
      %s26 = ssub.s32 %s18, %s25
      %p27 = scmp.eq.s32.totalorder %s26, 0
      %s29 = sadd.s32 %s28, 1
      %s30 = scalar_select %p27, %s28, %s29
      %p33 = pneg %p27
      %p34 = scmp.eq.s32.totalorder %s18, 1
      %p35 = por %p33, %p34
      %p36 = scmp.ne.s32.totalorder %s28, %s31
      %p37 = scmp.eq.s32.totalorder %s18, 0
      %p38 = por %p36, %p37
      %p39 = scmp.ne.s32.totalorder %s28, %s31
      %p40 = scmp.eq.s32.totalorder %s23, 1
      %p41 = por %p39, %p40
      %p42 = scmp.ne.s32.totalorder %s31, %s32
      %p43 = scmp.eq.s32.totalorder %s23, 0
      %p44 = por %p42, %p43
      %p45 = scmp.ne.s32.totalorder %s31, %s32
      %p46 = scmp.eq.s32.totalorder %s24, 1
      %p47 = por %p45, %p46
      %p49 = scmp.ne.s32.totalorder %s32, %s48
      %p50 = scmp.eq.s32.totalorder %s24, 0
      %p51 = por %p49, %p50
      %s53 = sadd.s32 %s52, 1
      %p56 = scmp.eq.s32.totalorder %s18, 1
      %p57 = scmp.ne.s32.totalorder %s52, %s54
      %p58 = scmp.eq.s32.totalorder %s18, 0
      %p59 = por %p57, %p58
      %p60 = scmp.ne.s32.totalorder %s52, %s54
      %p61 = scmp.eq.s32.totalorder %s23, 1
      %p62 = por %p60, %p61
      %p63 = scmp.ne.s32.totalorder %s54, %s55
      %p64 = scmp.eq.s32.totalorder %s23, 0
      %p65 = por %p63, %p64
      %p66 = scmp.ne.s32.totalorder %s54, %s55
      %p67 = scmp.eq.s32.totalorder %s24, 1
      %p68 = por %p66, %p67
      %p70 = scmp.ne.s32.totalorder %s55, %s69
      %p71 = scmp.eq.s32.totalorder %s24, 0
      %p72 = por %p70, %p71
      %s74 = sadd.s32 %s73, 1
      %p77 = scmp.eq.s32.totalorder %s18, 1
      %p78 = scmp.ne.s32.totalorder %s73, %s75
      %p79 = scmp.eq.s32.totalorder %s18, 0
      %p80 = por %p78, %p79
      %p81 = scmp.ne.s32.totalorder %s73, %s75
      %p82 = scmp.eq.s32.totalorder %s23, 1
      %p83 = por %p81, %p82
      %p84 = scmp.ne.s32.totalorder %s75, %s76
      %p85 = scmp.eq.s32.totalorder %s23, 0
      %p86 = por %p84, %p85
      %p87 = scmp.ne.s32.totalorder %s75, %s76
      %p88 = scmp.eq.s32.totalorder %s24, 1
      %p89 = por %p87, %p88
      %p91 = scmp.ne.s32.totalorder %s76, %s90
      %p92 = scmp.eq.s32.totalorder %s24, 0
      %p93 = por %p91, %p92
      %s95 = sadd.s32 %s94, 1
      %p98 = scmp.eq.s32.totalorder %s18, 1
      %p99 = scmp.ne.s32.totalorder %s94, %s96
      %p100 = scmp.eq.s32.totalorder %s18, 0
      %p101 = por %p99, %p100
      %p102 = scmp.ne.s32.totalorder %s94, %s96
      %p103 = scmp.eq.s32.totalorder %s23, 1
      %p104 = por %p102, %p103
      %p105 = scmp.ne.s32.totalorder %s96, %s97
      %p106 = scmp.eq.s32.totalorder %s23, 0
      %p107 = por %p105, %p106
      %p108 = scmp.ne.s32.totalorder %s96, %s97
      %p109 = scmp.eq.s32.totalorder %s24, 1
      %p110 = por %p108, %p109
      %p112 = scmp.ne.s32.totalorder %s97, %s111
      %p113 = scmp.eq.s32.totalorder %s24, 0
      %p114 = por %p112, %p113
      %s116 = sadd.s32 %s115, 1
      %p119 = scmp.eq.s32.totalorder %s18, 1
      %p120 = scmp.ne.s32.totalorder %s115, %s117
      %p121 = scmp.eq.s32.totalorder %s18, 0
      %p122 = por %p120, %p121
      %p123 = scmp.ne.s32.totalorder %s115, %s117
      %p124 = scmp.eq.s32.totalorder %s23, 1
      %p125 = por %p123, %p124
      %p126 = scmp.ne.s32.totalorder %s117, %s118
      %p127 = scmp.eq.s32.totalorder %s23, 0
      %p128 = por %p126, %p127
      %p129 = scmp.ne.s32.totalorder %s117, %s118
      %p130 = scmp.eq.s32.totalorder %s24, 1
      %p131 = por %p129, %p130
      %p133 = scmp.ne.s32.totalorder %s118, %s132
      %p134 = scmp.eq.s32.totalorder %s24, 0
      %p135 = por %p133, %p134
      %s136 = ssub.s32 %s18, %s25
      %p137 = scmp.eq.s32.totalorder %s136, 0
      %s139 = sadd.s32 %s138, 1
      %s140 = scalar_select %p137, %s138, %s139
      %p143 = pneg %p137
      %p144 = scmp.eq.s32.totalorder %s18, 1
      %p145 = por %p143, %p144
      %p146 = scmp.ne.s32.totalorder %s138, %s141
      %p147 = scmp.eq.s32.totalorder %s18, 0
      %p148 = por %p146, %p147
      %p149 = scmp.ne.s32.totalorder %s138, %s141
      %p150 = scmp.eq.s32.totalorder %s23, 1
      %p151 = por %p149, %p150
      %p152 = scmp.ne.s32.totalorder %s141, %s142
      %p153 = scmp.eq.s32.totalorder %s23, 0
      %p154 = por %p152, %p153
      %p155 = scmp.ne.s32.totalorder %s141, %s142
      %p156 = scmp.eq.s32.totalorder %s24, 1
      %p157 = por %p155, %p156
      %p159 = scmp.ne.s32.totalorder %s142, %s158
      %p160 = scmp.eq.s32.totalorder %s24, 0
      %p161 = por %p159, %p160
      %p162 = scmp.le.s32.totalorder 1, %s18
      %p163 = scmp.lt.s32.totalorder %s18, 3
      %p164 = pnand %p162, %p163
      %p165 = pneg %p164
      // Predicated region
      $region9: #{tpu_custom_call.1} parent=5 // pred_check
        _
      $region10: #{tpu_custom_call.1} parent=5 // pred_check_branch
        %167 = sbr.rel (%p164) target = $region12
      $region11: #{tpu_custom_call.1} parent=5 // pred_region
        %s168 = ssub.s32 %s18, 1
        // Predicated region
        $region13: #{tpu_custom_call.1} parent=11 // pred_check
          %p169 = pneg %p65
        $region14: #{tpu_custom_call.1} parent=11 // pred_check_branch
          %171 = sbr.rel (%p169) target = $region16
        $region15: #{tpu_custom_call.1} parent=11 // pred_region
          %173 = vsyncadd [#allocation6], 0
          %s174 = sshll.u32 %s1, 4
          %s175 = int_to_ptr.hbm [resolvable:$true] %s174
          %s176 = sshll.u32 [#allocation5], 4
          %s177 = int_to_ptr.vmem [resolvable:$true] %s176
          %182 = dma.hbm_to_vmem [thread:$0]  %s175, 768, %s177, [#allocation6], 64, 64, 4
        $region16: #{tpu_custom_call.1} parent=11 // pred_fallthru
          _
        // Predicated region
        $region17: #{tpu_custom_call.1} parent=11 // pred_check
          %p183 = pneg %p86
        $region18: #{tpu_custom_call.1} parent=11 // pred_check_branch
          %185 = sbr.rel (%p183) target = $region20
        $region19: #{tpu_custom_call.1} parent=11 // pred_region
          _
        $region20: #{tpu_custom_call.1} parent=11 // pred_fallthru
          _
        // Predicated region
        $region21: #{tpu_custom_call.1} parent=11 // pred_check
          %p186 = pneg %p107
        $region22: #{tpu_custom_call.1} parent=11 // pred_check_branch
          %188 = sbr.rel (%p186) target = $region24
        $region23: #{tpu_custom_call.1} parent=11 // pred_region
          %190 = vsyncadd [#allocation6], 0
          %s191 = sshll.u32 %s3, 4
          %s192 = int_to_ptr.hbm [resolvable:$true] %s191
          %s193 = sshll.u32 [#allocation7], 4
          %s194 = int_to_ptr.vmem [resolvable:$true] %s193
          %199 = dma.hbm_to_vmem [thread:$0]  %s192, 256, %s194, [#allocation6], 64, 64, 4
        $region24: #{tpu_custom_call.1} parent=11 // pred_fallthru
          _
        // Predicated region
        $region25: #{tpu_custom_call.1} parent=11 // pred_check
          %p200 = pneg %p128
        $region26: #{tpu_custom_call.1} parent=11 // pred_check_branch
          %202 = sbr.rel (%p200) target = $region28
        $region27: #{tpu_custom_call.1} parent=11 // pred_region
          _
        $region28: #{tpu_custom_call.1} parent=11 // pred_fallthru
          _
      $region12: #{tpu_custom_call.1} parent=5 // pred_fallthru
        _
      %p203 = scmp.lt.s32.totalorder %s18, 2
      // Predicated region
      $region29: #{tpu_custom_call.1} parent=5 // pred_check
        %p204 = pneg %p203
      $region30: #{tpu_custom_call.1} parent=5 // pred_check_branch
        %206 = sbr.rel (%p204) target = $region32
      $region31: #{tpu_custom_call.1} parent=5 // pred_region
        // Predicated region
        $region33: #{tpu_custom_call.1} parent=31 // pred_check
          %p207 = pneg %p38
        $region34: #{tpu_custom_call.1} parent=31 // pred_check_branch
          %209 = sbr.rel (%p207) target = $region36
        $region35: #{tpu_custom_call.1} parent=31 // pred_region
          %s210 = sand.u32 %s28, 1
          %s211 = scalar_lea.sflag [#allocation3], %s210
          %s212 = sand.u32 %s28, 1
          %s213 = smul.addr %s212, 8
          %s214 = scalar_lea.vmem [#allocation2], %s213
          %216 = vsyncadd %s211, 0
          %s217 = smul.addr %s18, 8
          %s218 = scalar_lea.hbm %s0, %s217
          %s220 = sshll.u32 %s218, 4
          %s221 = int_to_ptr.hbm [resolvable:$true] %s220
          %s222 = sshll.u32 %s214, 4
          %s223 = int_to_ptr.vmem [resolvable:$true] %s222
          %225 = dma.hbm_to_vmem [thread:$0]  %s221, 128, %s223, %s211
        $region36: #{tpu_custom_call.1} parent=31 // pred_fallthru
          _
      $region32: #{tpu_custom_call.1} parent=5 // pred_fallthru
        _
      %p226 = scmp.le.s32.totalorder 1, %s18
      %p227 = scmp.lt.s32.totalorder %s18, 3
      %p228 = pnand %p226, %p227
      %p229 = pneg %p228
      // Predicated region
      $region37: #{tpu_custom_call.1} parent=5 // pred_check
        _
      $region38: #{tpu_custom_call.1} parent=5 // pred_check_branch
        %231 = sbr.rel (%p228) target = $region40
      $region39: #{tpu_custom_call.1} parent=5 // pred_region
        %s232 = ssub.s32 %s18, 1
        %s233 = sand.u32 %s31, 1
        %s234 = scalar_lea.sflag [#allocation3], %s233
        %s235 = sand.u32 %s31, 1
        %s236 = smul.addr %s235, 8
        %s237 = scalar_lea.vmem [#allocation2], %s236
        // Predicated region
        $region41: #{tpu_custom_call.1} parent=39 // pred_check
          %p238 = pneg %p44
        $region42: #{tpu_custom_call.1} parent=39 // pred_check_branch
          %240 = sbr.rel (%p238) target = $region44
        $region43: #{tpu_custom_call.1} parent=39 // pred_region
          %242 = dma.done %s234, 128
        $region44: #{tpu_custom_call.1} parent=39 // pred_fallthru
          _
        // Predicated region
        $region45: #{tpu_custom_call.1} parent=39 // pred_check
          %p243 = pneg %p65
        $region46: #{tpu_custom_call.1} parent=39 // pred_check_branch
          %245 = sbr.rel (%p243) target = $region48
        $region47: #{tpu_custom_call.1} parent=39 // pred_region
          %247 = dma.done [#allocation6], 768
        $region48: #{tpu_custom_call.1} parent=39 // pred_fallthru
          _
        // Predicated region
        $region49: #{tpu_custom_call.1} parent=39 // pred_check
          %p248 = pneg %p107
        $region50: #{tpu_custom_call.1} parent=39 // pred_check_branch
          %250 = sbr.rel (%p248) target = $region52
        $region51: #{tpu_custom_call.1} parent=39 // pred_region
          %252 = dma.done [#allocation6], 256
        $region52: #{tpu_custom_call.1} parent=39 // pred_fallthru
          _
        %s253 = sand.u32 %s31, 1
        %s254 = scalar_lea.sflag [#allocation3], %s253
        %s255 = sand.u32 %s31, 1
        %s256 = smul.addr %s255, 8
        %s257 = scalar_lea.vmem [#allocation2], %s256
        %p258 = pneg %p44
        %p259 = pneg %p41
        %p260 = pneg %p65
        %p261 = pneg %p62
        %p262 = pneg %p86
        %p263 = pneg %p83
        %p264 = pneg %p107
        %p265 = pneg %p104
        %p266 = pneg %p128
        %p267 = pneg %p125
        %p268 = pneg %p154
        %p269 = pneg %p151
        %s270 = sand.u32 %s141, 1
        %s271 = scalar_lea.sflag [#allocation4], %s270
        %s272 = sand.u32 %s141, 1
        %s273 = smul.addr %s272, 8
        %s274 = scalar_lea.vmem [#allocation8], %s273
        %v276 = vld [vmem:[%s237] sm:$0xff]
        %v277 = vpack.c.bf16 %v276, %v276
        %v278 = vld [vmem:[#allocation5] sm:$0xf]
        %v279 = vld [vmem:[#allocation5 + $0x4] sm:$0xf]
        %v280 = vld [vmem:[#allocation5 + $0x8] sm:$0xf]
        %v281 = vld [vmem:[#allocation5 + $0xc] sm:$0xf]
        %v282 = vld [vmem:[#allocation5 + $0x10] sm:$0xf]
        %v283 = vld [vmem:[#allocation5 + $0x14] sm:$0xf]
        %v284 = vld [vmem:[#allocation5 + $0x18] sm:$0xf]
        %v285 = vld [vmem:[#allocation5 + $0x1c] sm:$0xf]
        %v286 = vld [vmem:[#allocation5 + $0x20] sm:$0xf]
        %v287 = vld [vmem:[#allocation5 + $0x24] sm:$0xf]
        %v288 = vld [vmem:[#allocation5 + $0x28] sm:$0xf]
        %v289 = vld [vmem:[#allocation5 + $0x2c] sm:$0xf]
        %v290 = vld [vmem:[%s2] sm:$0x1]
        %v292 = vperm.slane %v290, 0
        %v306 = vunpack.c.l.b16 %v278
        %v307 = vunpack.c.l.b16 %v279
        %v308 = vunpack.c.l.b16 %v280
        %v309 = vunpack.c.l.b16 %v281
        %v310 = vunpack.c.l.b16 %v282
        %v311 = vunpack.c.l.b16 %v283
        %v312 = vunpack.c.l.b16 %v284
        %v313 = vunpack.c.l.b16 %v285
        %v314 = vunpack.c.l.b16 %v286
        %v315 = vunpack.c.l.b16 %v287
        %v316 = vunpack.c.l.b16 %v288
        %v317 = vunpack.c.l.b16 %v289
        %v318 = vpack.c.b16 %v307, %v306
        %v319 = vpack.c.b16 %v309, %v308
        %v320 = vpack.c.b16 %v311, %v310
        %v321 = vpack.c.b16 %v313, %v312
        %v322 = vpack.c.b16 %v315, %v314
        %v323 = vpack.c.b16 %v317, %v316
        %vm330 = vcmask 785408
        %v332 = vsel %vm330, %v277, 0
        %334 = vmatpush.bf16.msra.mxu0 0
        %335 = vmatpush.bf16.msra.mxu0 0
        %336 = vmatpush.bf16.msra.mxu0 %v323
        %337 = vmatpush.bf16.msra.mxu0 %v322
        %338 = vmatpush.bf16.msra.mxu0 %v321
        %339 = vmatpush.bf16.msra.mxu0 %v320
        %340 = vmatpush.bf16.msra.mxu0 %v319
        %341 = vmatpush.bf16.msra.mxu0 %v318
        %342 = vmatmul.bf16.gmra.mxu0 %v332
        %v343 = vpop.f32.mrf.mxu0
        %v344 = vadd.f32 %v292, %v343
        %v345 = vpop.f32.mrf.mxu0
        %346 = vdwg.mxu0
        %v347 = vmax.f32 %v344, 0.0
        %v348 = vpack.c.bf16 %v347, %v347
        %v349 = vld [vmem:[#allocation7] sm:$0xf]
        %v350 = vld [vmem:[#allocation7 + $0x4] sm:$0xf]
        %v351 = vld [vmem:[#allocation7 + $0x8] sm:$0xf]
        %v352 = vld [vmem:[#allocation7 + $0xc] sm:$0xf]
        %v353 = vld [vmem:[%s4] sm:$0x1]
        %v355 = vunpack.c.l.b16 %v348
        %v356 = vpack.c.b16 %v355, %v355
        %357 = vrot.lane.b32.xlu0 %v356, 96
        %v358 = vpop.permute.xlu0 %357
        %vm359 = vcmask 64512
        %v361 = vsel %vm359, %v348, 0
        %v364 = vsel %vm359, %v358, 0
        %366 = vmatpush.bf16.xpose.msra.mxu0 0
        %367 = vmatpush.bf16.xpose.msra.mxu0 0
        %368 = vmatpush.bf16.xpose.msra.mxu0 0
        %369 = vmatpush.bf16.xpose.msra.mxu0 0
        %370 = vmatpush.bf16.xpose.msra.mxu0 0
        %371 = vmatpush.bf16.xpose.msra.mxu0 0
        %372 = vmatpush.bf16.xpose.msra.mxu0 0
        %373 = vmatpush.bf16.xpose.msra.mxu0 %v364
        %374 = vmatmul.bf16.gmra.mxu0 %v361
        %v375 = vpop.f32.mrf.mxu0
        %v376 = vadd.f32 0.0, %v375
        %v377 = vpop.f32.mrf.mxu0
        %378 = vdwg.mxu0
        %v379 = vmul.f32 %v376, 0.35355338
        %v380 = vsel %vm359, %v379, -inf
        %381 = vmax.xlane.f32.xlu0 %v380
        %v382 = vpop.xlane.xlu0 %381
        %v383 = vsub.f32 %v379, %v382
        %v384 = vmul.f32 %v383, 1.442695
        %v385 = vpow.pop %v384
        %v386 = vsel %vm359, %v385, 0.0
        %387 = vadd.xlane.f32.xlu0 %v386
        %v388 = vpop.xlane.xlu0 %387
        %v389 = vrcp.pop %v388
        %v390 = vmul.f32 %v385, %v389
        %v391 = vpack.c.bf16 %v390, %v390
        %392 = vrot.lane.b32.xlu0 %v356, 64
        %v393 = vpop.permute.xlu0 %392
        %v395 = vsel %vm359, %v391, 0
        %vm397 = vcmask 1043456
        %v399 = vsel %vm397, %v393, 0
        %401 = vmatpush.bf16.msra.mxu0 0
        %402 = vmatpush.bf16.msra.mxu0 0
        %403 = vmatpush.bf16.msra.mxu0 0
        %404 = vmatpush.bf16.msra.mxu0 0
        %405 = vmatpush.bf16.msra.mxu0 0
        %406 = vmatpush.bf16.msra.mxu0 0
        %407 = vmatpush.bf16.msra.mxu0 0
        %408 = vmatpush.bf16.msra.mxu0 %v399
        %409 = vmatmul.bf16.gmra.mxu0 %v395
        %v410 = vpop.f32.mrf.mxu0
        %v411 = vadd.f32 0.0, %v410
        %v412 = vpop.f32.mrf.mxu0
        %413 = vdwg.mxu0
        %v414 = vpack.c.bf16 %v411, %v411
        %415 = vrot.lane.b32.xlu0 %v356, 120
        %v416 = vpop.permute.xlu0 %415
        %417 = vrot.lane.b32.xlu0 %v356, 88
        %v418 = vpop.permute.xlu0 %417
        %v420 = vsel %vm359, %v416, 0
        %v423 = vsel %vm359, %v418, 0
        %425 = vmatpush.bf16.xpose.msra.mxu0 0
        %426 = vmatpush.bf16.xpose.msra.mxu0 0
        %427 = vmatpush.bf16.xpose.msra.mxu0 0
        %428 = vmatpush.bf16.xpose.msra.mxu0 0
        %429 = vmatpush.bf16.xpose.msra.mxu0 0
        %430 = vmatpush.bf16.xpose.msra.mxu0 0
        %431 = vmatpush.bf16.xpose.msra.mxu0 0
        %432 = vmatpush.bf16.xpose.msra.mxu0 %v423
        %433 = vmatmul.bf16.gmra.mxu0 %v420
        %v434 = vpop.f32.mrf.mxu0
        %v435 = vadd.f32 0.0, %v434
        %v436 = vpop.f32.mrf.mxu0
        %437 = vdwg.mxu0
        %v438 = vmul.f32 %v435, 0.35355338
        %v439 = vsel %vm359, %v438, -inf
        %440 = vmax.xlane.f32.xlu0 %v439
        %v441 = vpop.xlane.xlu0 %440
        %v442 = vsub.f32 %v438, %v441
        %v443 = vmul.f32 %v442, 1.442695
        %v444 = vpow.pop %v443
        %v445 = vsel %vm359, %v444, 0.0
        %446 = vadd.xlane.f32.xlu0 %v445
        %v447 = vpop.xlane.xlu0 %446
        %v448 = vrcp.pop %v447
        %v449 = vmul.f32 %v444, %v448
        %v450 = vpack.c.bf16 %v449, %v449
        %451 = vrot.lane.b32.xlu0 %v356, 56
        %v452 = vpop.permute.xlu0 %451
        %v454 = vsel %vm359, %v450, 0
        %v457 = vsel %vm397, %v452, 0
        %459 = vmatpush.bf16.msra.mxu0 0
        %460 = vmatpush.bf16.msra.mxu0 0
        %461 = vmatpush.bf16.msra.mxu0 0
        %462 = vmatpush.bf16.msra.mxu0 0
        %463 = vmatpush.bf16.msra.mxu0 0
        %464 = vmatpush.bf16.msra.mxu0 0
        %465 = vmatpush.bf16.msra.mxu0 0
        %466 = vmatpush.bf16.msra.mxu0 %v457
        %467 = vmatmul.bf16.gmra.mxu0 %v454
        %v468 = vpop.f32.mrf.mxu0
        %v469 = vadd.f32 0.0, %v468
        %v470 = vpop.f32.mrf.mxu0
        %471 = vdwg.mxu0
        %v472 = vpack.c.bf16 %v469, %v469
        %v474 = vsel %vm359, %v472, 0
        %v477 = vsel %vm397, %v350, 0
        %479 = vmatpush.bf16.msra.mxu0 0
        %480 = vmatpush.bf16.msra.mxu0 0
        %481 = vmatpush.bf16.msra.mxu0 0
        %482 = vmatpush.bf16.msra.mxu0 0
        %483 = vmatpush.bf16.msra.mxu0 0
        %484 = vmatpush.bf16.msra.mxu0 0
        %485 = vmatpush.bf16.msra.mxu0 0
        %486 = vmatpush.bf16.msra.mxu0 %v477
        %487 = vmatmul.bf16.gmra.mxu0 %v474
        %v488 = vpop.f32.mrf.mxu0
        %v489 = vadd.f32 0.0, %v488
        %v490 = vpop.f32.mrf.mxu0
        %491 = vdwg.mxu0
        %v493 = vsel %vm359, %v414, 0
        %v496 = vsel %vm397, %v349, 0
        %498 = vmatpush.bf16.msra.mxu0 0
        %499 = vmatpush.bf16.msra.mxu0 0
        %500 = vmatpush.bf16.msra.mxu0 0
        %501 = vmatpush.bf16.msra.mxu0 0
        %502 = vmatpush.bf16.msra.mxu0 0
        %503 = vmatpush.bf16.msra.mxu0 0
        %504 = vmatpush.bf16.msra.mxu0 0
        %505 = vmatpush.bf16.msra.mxu0 %v496
        %506 = vmatmul.bf16.gmra.mxu0 %v493
        %v507 = vpop.f32.mrf.mxu0
        %v508 = vadd.f32 %v489, %v507
        %v509 = vpop.f32.mrf.mxu0
        %510 = vdwg.mxu0
        %511 = vrot.lane.b32.xlu0 %v356, 112
        %v512 = vpop.permute.xlu0 %511
        %513 = vrot.lane.b32.xlu0 %v356, 80
        %v514 = vpop.permute.xlu0 %513
        %v516 = vsel %vm359, %v512, 0
        %v519 = vsel %vm359, %v514, 0
        %521 = vmatpush.bf16.xpose.msra.mxu0 0
        %522 = vmatpush.bf16.xpose.msra.mxu0 0
        %523 = vmatpush.bf16.xpose.msra.mxu0 0
        %524 = vmatpush.bf16.xpose.msra.mxu0 0
        %525 = vmatpush.bf16.xpose.msra.mxu0 0
        %526 = vmatpush.bf16.xpose.msra.mxu0 0
        %527 = vmatpush.bf16.xpose.msra.mxu0 0
        %528 = vmatpush.bf16.xpose.msra.mxu0 %v519
        %529 = vmatmul.bf16.gmra.mxu0 %v516
        %v530 = vpop.f32.mrf.mxu0
        %v531 = vadd.f32 0.0, %v530
        %v532 = vpop.f32.mrf.mxu0
        %533 = vdwg.mxu0
        %v534 = vmul.f32 %v531, 0.35355338
        %v535 = vsel %vm359, %v534, -inf
        %536 = vmax.xlane.f32.xlu0 %v535
        %v537 = vpop.xlane.xlu0 %536
        %v538 = vsub.f32 %v534, %v537
        %v539 = vmul.f32 %v538, 1.442695
        %v540 = vpow.pop %v539
        %v541 = vsel %vm359, %v540, 0.0
        %542 = vadd.xlane.f32.xlu0 %v541
        %v543 = vpop.xlane.xlu0 %542
        %v544 = vrcp.pop %v543
        %v545 = vmul.f32 %v540, %v544
        %v546 = vpack.c.bf16 %v545, %v545
        %547 = vrot.lane.b32.xlu0 %v356, 48
        %v548 = vpop.permute.xlu0 %547
        %v550 = vsel %vm359, %v546, 0
        %v553 = vsel %vm397, %v548, 0
        %555 = vmatpush.bf16.msra.mxu0 0
        %556 = vmatpush.bf16.msra.mxu0 0
        %557 = vmatpush.bf16.msra.mxu0 0
        %558 = vmatpush.bf16.msra.mxu0 0
        %559 = vmatpush.bf16.msra.mxu0 0
        %560 = vmatpush.bf16.msra.mxu0 0
        %561 = vmatpush.bf16.msra.mxu0 0
        %562 = vmatpush.bf16.msra.mxu0 %v553
        %563 = vmatmul.bf16.gmra.mxu0 %v550
        %v564 = vpop.f32.mrf.mxu0
        %v565 = vadd.f32 0.0, %v564
        %v566 = vpop.f32.mrf.mxu0
        %567 = vdwg.mxu0
        %v568 = vpack.c.bf16 %v565, %v565
        %v570 = vsel %vm359, %v568, 0
        %v573 = vsel %vm397, %v351, 0
        %575 = vmatpush.bf16.msra.mxu0 0
        %576 = vmatpush.bf16.msra.mxu0 0
        %577 = vmatpush.bf16.msra.mxu0 0
        %578 = vmatpush.bf16.msra.mxu0 0
        %579 = vmatpush.bf16.msra.mxu0 0
        %580 = vmatpush.bf16.msra.mxu0 0
        %581 = vmatpush.bf16.msra.mxu0 0
        %582 = vmatpush.bf16.msra.mxu0 %v573
        %583 = vmatmul.bf16.gmra.mxu0 %v570
        %v584 = vpop.f32.mrf.mxu0
        %v585 = vadd.f32 0.0, %v584
        %v586 = vpop.f32.mrf.mxu0
        %587 = vdwg.mxu0
        %v588 = vadd.f32 %v508, %v585
        %589 = vrot.lane.b32.xlu0 %v356, 104
        %v590 = vpop.permute.xlu0 %589
        %591 = vrot.lane.b32.xlu0 %v356, 72
        %v592 = vpop.permute.xlu0 %591
        %v594 = vsel %vm359, %v590, 0
        %v597 = vsel %vm359, %v592, 0
        %599 = vmatpush.bf16.xpose.msra.mxu0 0
        %600 = vmatpush.bf16.xpose.msra.mxu0 0
        %601 = vmatpush.bf16.xpose.msra.mxu0 0
        %602 = vmatpush.bf16.xpose.msra.mxu0 0
        %603 = vmatpush.bf16.xpose.msra.mxu0 0
        %604 = vmatpush.bf16.xpose.msra.mxu0 0
        %605 = vmatpush.bf16.xpose.msra.mxu0 0
        %606 = vmatpush.bf16.xpose.msra.mxu0 %v597
        %607 = vmatmul.bf16.gmra.mxu0 %v594
        %v608 = vpop.f32.mrf.mxu0
        %v609 = vadd.f32 0.0, %v608
        %v610 = vpop.f32.mrf.mxu0
        %611 = vdwg.mxu0
        %v612 = vmul.f32 %v609, 0.35355338
        %v613 = vsel %vm359, %v612, -inf
        %614 = vmax.xlane.f32.xlu0 %v613
        %v615 = vpop.xlane.xlu0 %614
        %v616 = vsub.f32 %v612, %v615
        %v617 = vmul.f32 %v616, 1.442695
        %v618 = vpow.pop %v617
        %v619 = vsel %vm359, %v618, 0.0
        %620 = vadd.xlane.f32.xlu0 %v619
        %v621 = vpop.xlane.xlu0 %620
        %v622 = vrcp.pop %v621
        %v623 = vmul.f32 %v618, %v622
        %v624 = vpack.c.bf16 %v623, %v623
        %625 = vrot.lane.b32.xlu0 %v356, 40
        %v626 = vpop.permute.xlu0 %625
        %v628 = vsel %vm359, %v624, 0
        %v631 = vsel %vm397, %v626, 0
        %633 = vmatpush.bf16.msra.mxu0 0
        %634 = vmatpush.bf16.msra.mxu0 0
        %635 = vmatpush.bf16.msra.mxu0 0
        %636 = vmatpush.bf16.msra.mxu0 0
        %637 = vmatpush.bf16.msra.mxu0 0
        %638 = vmatpush.bf16.msra.mxu0 0
        %639 = vmatpush.bf16.msra.mxu0 0
        %640 = vmatpush.bf16.msra.mxu0 %v631
        %641 = vmatmul.bf16.gmra.mxu0 %v628
        %v642 = vpop.f32.mrf.mxu0
        %v643 = vadd.f32 0.0, %v642
        %v644 = vpop.f32.mrf.mxu0
        %645 = vdwg.mxu0
        %v646 = vpack.c.bf16 %v643, %v643
        %v648 = vsel %vm359, %v646, 0
        %v651 = vsel %vm397, %v352, 0
        %653 = vmatpush.bf16.msra.mxu0 0
        %654 = vmatpush.bf16.msra.mxu0 0
        %655 = vmatpush.bf16.msra.mxu0 0
        %656 = vmatpush.bf16.msra.mxu0 0
        %657 = vmatpush.bf16.msra.mxu0 0
        %658 = vmatpush.bf16.msra.mxu0 0
        %659 = vmatpush.bf16.msra.mxu0 0
        %660 = vmatpush.bf16.msra.mxu0 %v651
        %661 = vmatmul.bf16.gmra.mxu0 %v648
        %v662 = vpop.f32.mrf.mxu0
        %v663 = vadd.f32 0.0, %v662
        %v664 = vpop.f32.mrf.mxu0
        %665 = vdwg.mxu0
        %v666 = vadd.f32 %v588, %v663
        %v668 = vperm.slane %v353, 0
        %v670 = vadd.f32 %v666, %v668
        %v671 = vmax.f32 %v670, 0.0
        %vm672 = vcmask 261120
        %673 = vst.msk [vmem:[%s274] sm:$0xff] %vm672, %v671
        %s674 = sand.u32 %s141, 1
        %s675 = scalar_lea.sflag [#allocation4], %s674
        %s676 = sand.u32 %s141, 1
        %s677 = smul.addr %s676, 8
        %s678 = scalar_lea.vmem [#allocation8], %s677
        // Predicated region
        $region53: #{tpu_custom_call.1} parent=39 // pred_check
          %p679 = pneg %p151
        $region54: #{tpu_custom_call.1} parent=39 // pred_check_branch
          %681 = sbr.rel (%p679) target = $region56
        $region55: #{tpu_custom_call.1} parent=39 // pred_region
          %683 = vsyncadd %s675, 0
          %s684 = smul.addr %s23, 8
          %s685 = scalar_lea.hbm %s5, %s684
          %s687 = sshll.u32 %s678, 4
          %s688 = int_to_ptr.vmem [resolvable:$true] %s687
          %s689 = sshll.u32 %s685, 4
          %s690 = int_to_ptr.hbm [resolvable:$true] %s689
          %692 = dma.vmem_to_hbm [thread:$0]  %s688, 128, %s690, %s675
        $region56: #{tpu_custom_call.1} parent=39 // pred_fallthru
          _
      $region40: #{tpu_custom_call.1} parent=5 // pred_fallthru
        _
      %p693 = scmp.le.s32.totalorder 2, %s18
      // Predicated region
      $region57: #{tpu_custom_call.1} parent=5 // pred_check
        %p694 = pneg %p693
      $region58: #{tpu_custom_call.1} parent=5 // pred_check_branch
        %696 = sbr.rel (%p694) target = $region60
      $region59: #{tpu_custom_call.1} parent=5 // pred_region
        %s697 = ssub.s32 %s18, 2
        // Predicated region
        $region61: #{tpu_custom_call.1} parent=59 // pred_check
          %p698 = pneg %p157
        $region62: #{tpu_custom_call.1} parent=59 // pred_check_branch
          %700 = sbr.rel (%p698) target = $region64
        $region63: #{tpu_custom_call.1} parent=59 // pred_region
          %s701 = sand.u32 %s142, 1
          %s702 = scalar_lea.sflag [#allocation4], %s701
          %s703 = sand.u32 %s142, 1
          %s704 = smul.addr %s703, 8
          %s705 = scalar_lea.vmem [#allocation8], %s704
          %707 = dma.done %s702, 128
        $region64: #{tpu_custom_call.1} parent=59 // pred_fallthru
          _
      $region60: #{tpu_custom_call.1} parent=5 // pred_fallthru
        _
    $region6: #{tpu_custom_call.1} parent=1 // loop_footer
      %s22 = sadd.s32 1, %s18
    $region7: #{tpu_custom_call.1} parent=1 // loop_footer_branch
      %17 = sbr.rel target = $region3
    $region8: #{tpu_custom_call.1} parent=1 // loop_exit
      _
    %708 = vsyncpa [#allocation3], 1
    %s709 = scalar_lea.sflag [#allocation3], 1
    %710 = vsyncpa %s709, 1
    %711 = vsyncpa [#allocation6], 1
    %712 = vsyncpa [#allocation4], 1
    %s713 = scalar_lea.sflag [#allocation4], 1
    %714 = vsyncpa %s713, 1

</llo_original>
